<compile_context>
chip_gen: v6e
topology: v6e:2x2x1
jax: 0.10.0
libtpu: 0.0.40
codegen_flags: <defaults>
</compile_context>

<pallas_src>
import functools

import jax
import jax.numpy as jnp
import numpy as np
from jax.experimental import pallas as pl
from jax.experimental.pallas import tpu as pltpu


# ----------------------------- Pallas kernel ------------------------------- #

def _circular_pad_kernel(x_ref, o_ref, *, pad_top, W, half):
    """x_ref: VMEM (bb, cb, H*W);  o_ref: VMEM (bb, cb, (H+pad_top)*W)."""
    xf = x_ref[...]                                    # (bb, cb, H*W)

    # Body: the original image, verbatim, starting pad_top rows down.
    o_ref[:, :, pad_top * W:] = xf                     # single lane-dense store

    if pad_top == 0:
        return

    rw = W - half                                      # width of the right half
    if pad_top <= 8:
        # Tiny static number of padded rows: write each swapped row directly,
        # no intermediate concatenation, no full-output temporary.
        for r in range(pad_top):
            row = xf[:, :, r * W:(r + 1) * W]          # (bb, cb, W)
            if rw > 0:
                o_ref[:, :, r * W:r * W + rw] = row[:, :, half:]
            if half > 0:
                o_ref[:, :, r * W + rw:(r + 1) * W] = row[:, :, :half]
    else:
        # O(1)-op path for large pad_top: view the top slab as (.., pad_top, W),
        # swap halves with a single 2-piece concat, store once.
        bb, cb, _ = x_ref.shape
        top = xf[:, :, :pad_top * W].reshape(bb, cb, pad_top, W)
        swapped = jnp.concatenate([top[..., half:], top[..., :half]], axis=-1)
        o_ref[:, :, :pad_top * W] = swapped.reshape(bb, cb, pad_top * W)


# ------------------------------- wrapper ------------------------------------ #

def _largest_divisor(n, pred):
    best = None
    for d in range(1, n + 1):
        if n % d == 0 and pred(d):
            best = d
    return best


@functools.partial(jax.jit, static_argnames=("pad_top",))
def circular_pad(x, pad_top):
    B, C, H, W = x.shape
    if pad_top > H:
        raise ValueError(f"pad_top ({pad_top}) must be <= H ({H})")
    half = W // 2
    H_out = H + pad_top

    itemsize = jnp.dtype(x.dtype).itemsize
    per_bc = (H * W + H_out * W) * itemsize            # in+out bytes for one (b, c)
    budget = 8 * 1024 * 1024                           # per pipeline stage (x2 double-buffer)

    # Channel tile: full C if it fits, otherwise the largest multiple-of-8
    # divisor of C that fits (Mosaic 2nd-minor-dim rule).
    if C * per_bc <= budget:
        cb = C
    else:
        cb = _largest_divisor(C, lambda d: d % 8 == 0 and d * per_bc <= budget) or C

    # Batch tile: as many elements per step as fit, to amortize ~0.35 us/step.
    bb = _largest_divisor(B, lambda d: d * cb * per_bc <= budget) or 1

    kernel = functools.partial(_circular_pad_kernel,
                               pad_top=pad_top, W=W, half=half)
    out_flat = pl.pallas_call(
        kernel,
        out_shape=jax.ShapeDtypeStruct((B, C, H_out * W), x.dtype),
        grid=(B // bb, C // cb),
        in_specs=[pl.BlockSpec((bb, cb, H * W), lambda b, c: (b, c, 0))],
        out_specs=pl.BlockSpec((bb, cb, H_out * W), lambda b, c: (b, c, 0)),
        compiler_params=pltpu.CompilerParams(
            dimension_semantics=("parallel", "parallel"),
            vmem_limit_bytes=32 * 1024 * 1024,
        ),
    )(x.reshape(B, C, H * W))
    return out_flat.reshape(B, C, H_out, W)


# ------------------------------ numpy reference ----------------------------- #

def ref_circular_pad(x, pad_top):
    """Exact replica of the PyTorch CircularPad.forward."""
    half = x.shape[3] // 2
    top_left = x[:, :, :pad_top, :half]
    top_right = x[:, :, :pad_top, half:]
    top = np.concatenate([top_right, top_left], axis=3)
    return np.concatenate([top, x], axis=2)


# ----------------------------------- main ----------------------------------- #

if __name__ == "__main__":
    B, C, H, W = 2, 4, 16, 16
    pad_top = 3

    key = jax.random.PRNGKey(0)
    x = jax.random.normal(key, (B, C, H, W), dtype=jnp.float32)

    out = circular_pad(x, pad_top)
    out = jax.block_until_ready(out)
    assert out.shape == (B, C, H + pad_top, W)

    ref = ref_circular_pad(np.asarray(x), pad_top)
    np.testing.assert_array_equal(np.asarray(out), ref)

    print("KERNEL_OK")
</pallas_src>

<mosaic_0001>
module attributes {stable_mosaic.version = 11 : i64} {
  func.func @_circular_pad_kernel(%arg0: i32, %arg1: i32, %arg2: memref<2x4x256xf32, #tpu.memory_space<vmem>>, %arg3: memref<2x4x304xf32, #tpu.memory_space<vmem>>) attributes {dimension_semantics = [#tpu.dimension_semantics<parallel>, #tpu.dimension_semantics<parallel>], iteration_bounds = array<i64: 1, 1>, scalar_prefetch = 0 : i64, scratch_operands = 0 : i64, tpu.core_type = #tpu.core_type<tc>, window_params = [{transform_indices = @transform_0, window_bounds = array<i64: 2, 4, 256>}, {transform_indices = @transform_1, window_bounds = array<i64: 2, 4, 304>}]} {
    %c0 = arith.constant 0 : index
    %c0_0 = arith.constant 0 : index
    %c0_1 = arith.constant 0 : index
    %0 = vector.load %arg2[%c0, %c0_0, %c0_1] : memref<2x4x256xf32, #tpu.memory_space<vmem>>, vector<2x4x256xf32>
    %c0_2 = arith.constant 0 : index
    %c0_3 = arith.constant 0 : index
    %c48 = arith.constant 48 : index
    %1 = vector.load %arg3[%c0_2, %c0_3, %c48] : memref<2x4x304xf32, #tpu.memory_space<vmem>>, vector<2x4x256xf32>
    tpu.vector_store %arg3[%c0_2, %c0_3, %c48], %0 {strides = array<i32>} : memref<2x4x304xf32, #tpu.memory_space<vmem>>, vector<2x4x256xf32>,
    %2 = vector.extract_strided_slice %0 {offsets = [0, 0, 0], sizes = [2, 4, 16], strides = [1, 1, 1]} : vector<2x4x256xf32> to vector<2x4x16xf32>
    %3 = vector.extract_strided_slice %2 {offsets = [0, 0, 8], sizes = [2, 4, 8], strides = [1, 1, 1]} : vector<2x4x16xf32> to vector<2x4x8xf32>
    %c0_4 = arith.constant 0 : index
    %c0_5 = arith.constant 0 : index
    %c0_6 = arith.constant 0 : index
    %4 = vector.load %arg3[%c0_4, %c0_5, %c0_6] : memref<2x4x304xf32, #tpu.memory_space<vmem>>, vector<2x4x8xf32>
    tpu.vector_store %arg3[%c0_4, %c0_5, %c0_6], %3 {strides = array<i32>} : memref<2x4x304xf32, #tpu.memory_space<vmem>>, vector<2x4x8xf32>,
    %5 = vector.extract_strided_slice %2 {offsets = [0, 0, 0], sizes = [2, 4, 8], strides = [1, 1, 1]} : vector<2x4x16xf32> to vector<2x4x8xf32>
    %c0_7 = arith.constant 0 : index
    %c0_8 = arith.constant 0 : index
    %c8 = arith.constant 8 : index
    %6 = vector.load %arg3[%c0_7, %c0_8, %c8] : memref<2x4x304xf32, #tpu.memory_space<vmem>>, vector<2x4x8xf32>
    tpu.vector_store %arg3[%c0_7, %c0_8, %c8], %5 {strides = array<i32>} : memref<2x4x304xf32, #tpu.memory_space<vmem>>, vector<2x4x8xf32>,
    %7 = vector.extract_strided_slice %0 {offsets = [0, 0, 16], sizes = [2, 4, 16], strides = [1, 1, 1]} : vector<2x4x256xf32> to vector<2x4x16xf32>
    %8 = vector.extract_strided_slice %7 {offsets = [0, 0, 8], sizes = [2, 4, 8], strides = [1, 1, 1]} : vector<2x4x16xf32> to vector<2x4x8xf32>
    %c0_9 = arith.constant 0 : index
    %c0_10 = arith.constant 0 : index
    %c16 = arith.constant 16 : index
    %9 = vector.load %arg3[%c0_9, %c0_10, %c16] : memref<2x4x304xf32, #tpu.memory_space<vmem>>, vector<2x4x8xf32>
    tpu.vector_store %arg3[%c0_9, %c0_10, %c16], %8 {strides = array<i32>} : memref<2x4x304xf32, #tpu.memory_space<vmem>>, vector<2x4x8xf32>,
    %10 = vector.extract_strided_slice %7 {offsets = [0, 0, 0], sizes = [2, 4, 8], strides = [1, 1, 1]} : vector<2x4x16xf32> to vector<2x4x8xf32>
    %c0_11 = arith.constant 0 : index
    %c0_12 = arith.constant 0 : index
    %c24 = arith.constant 24 : index
    %11 = vector.load %arg3[%c0_11, %c0_12, %c24] : memref<2x4x304xf32, #tpu.memory_space<vmem>>, vector<2x4x8xf32>
    tpu.vector_store %arg3[%c0_11, %c0_12, %c24], %10 {strides = array<i32>} : memref<2x4x304xf32, #tpu.memory_space<vmem>>, vector<2x4x8xf32>,
    %12 = vector.extract_strided_slice %0 {offsets = [0, 0, 32], sizes = [2, 4, 16], strides = [1, 1, 1]} : vector<2x4x256xf32> to vector<2x4x16xf32>
    %13 = vector.extract_strided_slice %12 {offsets = [0, 0, 8], sizes = [2, 4, 8], strides = [1, 1, 1]} : vector<2x4x16xf32> to vector<2x4x8xf32>
    %c0_13 = arith.constant 0 : index
    %c0_14 = arith.constant 0 : index
    %c32 = arith.constant 32 : index
    %14 = vector.load %arg3[%c0_13, %c0_14, %c32] : memref<2x4x304xf32, #tpu.memory_space<vmem>>, vector<2x4x8xf32>
    tpu.vector_store %arg3[%c0_13, %c0_14, %c32], %13 {strides = array<i32>} : memref<2x4x304xf32, #tpu.memory_space<vmem>>, vector<2x4x8xf32>,
    %15 = vector.extract_strided_slice %12 {offsets = [0, 0, 0], sizes = [2, 4, 8], strides = [1, 1, 1]} : vector<2x4x16xf32> to vector<2x4x8xf32>
    %c0_15 = arith.constant 0 : index
    %c0_16 = arith.constant 0 : index
    %c40 = arith.constant 40 : index
    %16 = vector.load %arg3[%c0_15, %c0_16, %c40] : memref<2x4x304xf32, #tpu.memory_space<vmem>>, vector<2x4x8xf32>
    tpu.vector_store %arg3[%c0_15, %c0_16, %c40], %15 {strides = array<i32>} : memref<2x4x304xf32, #tpu.memory_space<vmem>>, vector<2x4x8xf32>,
    return
  }
  func.func @transform_0(%arg0: i32, %arg1: i32) -> (i32, i32, i32) {
    %c0_i32 = arith.constant 0 : i32
    %c0_i32_0 = arith.constant 0 : i32
    return %arg0, %arg1, %c0_i32 : i32, i32, i32
  }
  func.func @transform_1(%arg0: i32, %arg1: i32) -> (i32, i32, i32) {
    %c0_i32 = arith.constant 0 : i32
    %c0_i32_0 = arith.constant 0 : i32
    return %arg0, %arg1, %c0_i32 : i32, i32, i32
  }
}

</mosaic_0001>

<llo_original>
// kernel: circular_pad.1
$region0: #{circular_pad.1}
  #allocation0 [shape = 'u32[]', space=smem, size = 0x4, offset = 0x4, fixed_abs, tag = 'smem constant byte address 0x4 - core index']
  #allocation1 [shape = 'u32[144,128]{1,0:T(1,128)}', space=vmem, size = 0x12000, scoped, tag = 'internal scratch']
  %s0 = inlined_call_operand.vmem [shape: f32[2,4,256], index: 0, kind: input, shape index: {}]
  %s1 = inlined_call_operand.vmem [shape: f32[2,4,304], index: 1, kind: output, shape index: {}]
  %s2 = sld [smem:[#allocation0]]
  $region14: #{circular_pad.1} parent=0
    _
  %s4 = ssub.s32 1, %s2
  %s5 = scalar_select 0, %s4, %s2
  // Predicated region
  $region2: #{circular_pad.1} parent=0 // pred_check
    _
  $region3: #{circular_pad.1} parent=0 // pred_check_branch
    %7 = sbr.rel (0) target = $region5
  $region4: #{circular_pad.1} parent=0 // pred_region
    _
  $region5: #{circular_pad.1} parent=0 // pred_fallthru
    _
  %v8 = vld [vmem:[%s0] sm:$0xff]
  %v9 = vld [vmem:[%s0 + $0x8] sm:$0xff]
  %12 = vrot.lane.b32.xlu0 %v8, 48
  %v13 = vpop.permute.xlu0 %12
  %14 = vrot.lane.b32.xlu0 %v9, 48
  %v15 = vpop.permute.xlu0 %14
  %v16 = vrot.slane %v13, 4
  %v17 = vrot.slane %v15, 4
  %vm18 = vcmask 392192
  %v19 = vsel %vm18, %v16, %v13
  %v20 = vsel %vm18, %v17, %v15
  %vm25 = vcmask 1043840
  %vm26 = vcmask 1047556
  %vm27 = vmor %vm26, %vm25
  %28 = vst.msk [vmem:[%s1] sm:$0xff] %vm27, %v19
  %vm29 = vcmask 388096
  %30 = vst.msk [vmem:[%s1 + $0x8] sm:$0xf] %vm29, %v16
  %31 = vst.msk [vmem:[%s1 + $0xc] sm:$0xff] %vm27, %v20
  %32 = vst.msk [vmem:[%s1 + $0x14] sm:$0xf] %vm29, %v17
  %33 = vrot.lane.b32.xlu0 %v8, 120
  %v34 = vpop.permute.xlu0 %33
  %35 = vrot.lane.b32.xlu0 %v9, 120
  %v36 = vpop.permute.xlu0 %35
  %vm39 = vcmask 60416
  %40 = vst.msk [vmem:[%s1] sm:$0xf] %vm39, %v34
  %41 = vst.msk [vmem:[%s1 + $0xc] sm:$0xf] %vm39, %v36
  %42 = vrot.lane.b32.xlu0 %v8, 8
  %v43 = vpop.permute.xlu0 %42
  %44 = vrot.lane.b32.xlu0 %v9, 8
  %v45 = vpop.permute.xlu0 %44
  %vm48 = vcmask 126016
  %49 = vst.msk [vmem:[%s1] sm:$0xf] %vm48, %v43
  %50 = vst.msk [vmem:[%s1 + $0xc] sm:$0xf] %vm48, %v45
  %vm51 = vcmask 191616
  %52 = vst.msk [vmem:[%s1] sm:$0xf] %vm51, %v34
  %53 = vst.msk [vmem:[%s1 + $0xc] sm:$0xf] %vm51, %v36
  %vm54 = vcmask 257216
  %55 = vst.msk [vmem:[%s1] sm:$0xf] %vm54, %v43
  %56 = vst.msk [vmem:[%s1 + $0xc] sm:$0xf] %vm54, %v45
  %vm57 = vcmask 322816
  %58 = vst.msk [vmem:[%s1] sm:$0xf] %vm57, %v34
  %59 = vst.msk [vmem:[%s1 + $0xc] sm:$0xf] %vm57, %v36
  %vm60 = vcmask 388416
  %61 = vst.msk [vmem:[%s1] sm:$0xf] %vm60, %v43
  %62 = vst.msk [vmem:[%s1 + $0xc] sm:$0xf] %vm60, %v45
  // Predicated region
  $region6: #{circular_pad.1} parent=0 // pred_check
    _
  $region7: #{circular_pad.1} parent=0 // pred_check_branch
    %64 = sbr.rel (0) target = $region9
  $region8: #{circular_pad.1} parent=0 // pred_region
    _
  $region9: #{circular_pad.1} parent=0 // pred_fallthru
    _
  // Predicated region
  $region10: #{circular_pad.1} parent=0 // pred_check
    _
  $region11: #{circular_pad.1} parent=0 // pred_check_branch
    %66 = sbr.rel (0) target = $region13
  $region12: #{circular_pad.1} parent=0 // pred_region
    _
  $region13: #{circular_pad.1} parent=0 // pred_fallthru
    _

</llo_original>
